<compile_context>
chip_gen: v6e
topology: v6e:2x2x1
jax: 0.10.0
libtpu: 0.0.40
codegen_flags: <defaults>
</compile_context>

<pallas_src>
import jax
import jax.numpy as jnp
from jax.experimental import pallas as pl
from jax.experimental.pallas import tpu as pltpu


def _round_up(n, m):
    return ((n + m - 1) // m) * m


def mlp_kernel(x_ref, wfc_ref, bfc_ref, wproj_ref, bproj_ref, o_ref):
    # bf16 operands straight into the MXU, f32 accumulation.
    x = x_ref[...]                                                    # [tm, Dip] bf16
    y = jnp.dot(x, wfc_ref[...], preferred_element_type=jnp.float32)  # [tm, Dmp] f32
    y = y + bfc_ref[...]                                              # f32 bias add (VPU)
    y = y.astype(jnp.bfloat16)                                        # keep 2nd matmul on bf16 MXU path
    z = jnp.dot(y, wproj_ref[...], preferred_element_type=jnp.float32)
    z = z + bproj_ref[...]
    o_ref[...] = z.astype(o_ref.dtype)


def mlp_forward(x, w_fc, b_fc, w_proj, b_proj, *, tm=None):
    """Fused MLP forward: z = (x @ w_fc.T + b_fc) @ w_proj.T + b_proj.

    x:      [T, D_in]      (f16 in the reference module)
    w_fc:   [D_mid, D_in]  (PyTorch Linear weight layout)
    b_fc:   [D_mid]
    w_proj: [D_in, D_mid]
    b_proj: [D_in]
    """
    T, D_in = x.shape
    D_mid = w_fc.shape[0]
    out_dtype = x.dtype

    # ---- glue (plain JAX, outside the kernel) --------------------------------
    # bf16 at the pallas_call boundary: native MXU operand format on v5e/v6e/v7x.
    xb = x.astype(jnp.bfloat16)
    wfc_t = w_fc.T.astype(jnp.bfloat16)        # [D_in, D_mid]
    wpr_t = w_proj.T.astype(jnp.bfloat16)      # [D_mid, D_in]
    bfc = b_fc.astype(jnp.float32).reshape(1, D_mid)
    bpr = b_proj.astype(jnp.float32).reshape(1, D_in)

    # Pad lane dims to multiples of 128 (lane-dense loads/stores) and pad the
    # token dim to a multiple of tm (no silently dropped tail rows).
    d_in_p = _round_up(D_in, 128)
    d_mid_p = _round_up(D_mid, 128)
    if tm is None:
        tm = min(256, _round_up(T, 16))        # multiple of bf16 sublane pack
    t_p = _round_up(T, tm)

    xb = jnp.pad(xb, ((0, t_p - T), (0, d_in_p - D_in)))
    wfc_t = jnp.pad(wfc_t, ((0, d_in_p - D_in), (0, d_mid_p - D_mid)))
    wpr_t = jnp.pad(wpr_t, ((0, d_mid_p - D_mid), (0, d_in_p - D_in)))
    bfc = jnp.pad(bfc, ((0, 0), (0, d_mid_p - D_mid)))
    bpr = jnp.pad(bpr, ((0, 0), (0, d_in_p - D_in)))

    grid = (t_p // tm,)

    z_pad = pl.pallas_call(
        mlp_kernel,
        out_shape=jax.ShapeDtypeStruct((t_p, d_in_p), jnp.bfloat16),
        grid_spec=pltpu.PrefetchScalarGridSpec(
            num_scalar_prefetch=0,
            grid=grid,
            in_specs=[
                pl.BlockSpec((tm, d_in_p), lambda i: (i, 0)),       # x tile
                pl.BlockSpec((d_in_p, d_mid_p), lambda i: (0, 0)),  # W_fc^T (grid-invariant)
                pl.BlockSpec((1, d_mid_p), lambda i: (0, 0)),       # b_fc
                pl.BlockSpec((d_mid_p, d_in_p), lambda i: (0, 0)),  # W_proj^T (grid-invariant)
                pl.BlockSpec((1, d_in_p), lambda i: (0, 0)),        # b_proj
            ],
            out_specs=pl.BlockSpec((tm, d_in_p), lambda i: (i, 0)),
        ),
        compiler_params=pltpu.CompilerParams(
            # Token-tile axis is independent -> shards across v7x's 2 TensorCores.
            dimension_semantics=("parallel",)),
    )(xb, wfc_t, bfc, wpr_t, bpr)

    # TODO(synk): for production-sized D_in/D_mid, add a K-tiled reduction grid
    # axis (weights no longer whole-VMEM-resident) so the kernel fits v7x's
    # 64 MiB VMEM instead of keeping both weight matrices resident.
    return z_pad[:T, :D_in].astype(out_dtype)


def _ref_bf16(x, w_fc, b_fc, w_proj, b_proj):
    """Reference mirroring the kernel numerics: bf16 operands, f32 accumulate."""
    xf = x.astype(jnp.bfloat16).astype(jnp.float32)
    wf = w_fc.astype(jnp.bfloat16).astype(jnp.float32)
    wp = w_proj.astype(jnp.bfloat16).astype(jnp.float32)
    y = xf @ wf.T + b_fc.astype(jnp.float32)
    y = y.astype(jnp.bfloat16).astype(jnp.float32)
    return y @ wp.T + b_proj.astype(jnp.float32)


if __name__ == "__main__":
    # Shapes consistent with the module: tokens_per_expert = total_tokens // expert_cnt
    total_tokens, expert_cnt = 16, 2
    tokens_per_expert = total_tokens // expert_cnt   # 8
    input_dim, middle_dim = 32, 64
    dtype = jnp.float16

    key = jax.random.PRNGKey(0)
    k1, k2, k3, k4, k5 = jax.random.split(key, 5)

    x = jax.random.normal(k1, (tokens_per_expert, input_dim), dtype=jnp.float32).astype(dtype)
    bound_fc = 1.0 / (input_dim ** 0.5)
    w_fc = (jax.random.uniform(k2, (middle_dim, input_dim), minval=-bound_fc, maxval=bound_fc)
            .astype(dtype))
    b_fc = (jax.random.uniform(k3, (middle_dim,), minval=-bound_fc, maxval=bound_fc)
            .astype(dtype))
    bound_pr = 1.0 / (middle_dim ** 0.5)
    w_proj = (jax.random.uniform(k4, (input_dim, middle_dim), minval=-bound_pr, maxval=bound_pr)
              .astype(dtype))
    b_proj = (jax.random.uniform(k5, (input_dim,), minval=-bound_pr, maxval=bound_pr)
              .astype(dtype))

    z = mlp_forward(x, w_fc, b_fc, w_proj, b_proj)
    z = jax.block_until_ready(z)
    assert z.shape == (tokens_per_expert, input_dim)
    assert z.dtype == dtype

    # Check 1: against a reference that mimics the kernel's bf16/f32 numerics.
    z_ref = _ref_bf16(x, w_fc, b_fc, w_proj, b_proj)
    assert jnp.allclose(z.astype(jnp.float32), z_ref, atol=1e-2, rtol=1e-2)

    # Check 2: against pure-f32 module semantics (looser tol covers bf16 quantization).
    z32 = x.astype(jnp.float32) @ w_fc.T.astype(jnp.float32) + b_fc.astype(jnp.float32)
    z32 = z32 @ w_proj.T.astype(jnp.float32) + b_proj.astype(jnp.float32)
    assert jnp.allclose(z.astype(jnp.float32), z32, atol=5e-2, rtol=5e-2)

    # Check 3: a larger case exercising the multi-step ("parallel") grid and the
    # no-padding (already lane-dense) path.
    T2, D_in2, D_mid2 = 512, 256, 512
    kk = jax.random.split(jax.random.PRNGKey(1), 5)
    x2 = jax.random.normal(kk[0], (T2, D_in2), dtype=jnp.float32).astype(dtype)
    b1 = 1.0 / (D_in2 ** 0.5)
    w_fc2 = jax.random.uniform(kk[1], (D_mid2, D_in2), minval=-b1, maxval=b1).astype(dtype)
    b_fc2 = jax.random.uniform(kk[2], (D_mid2,), minval=-b1, maxval=b1).astype(dtype)
    b2 = 1.0 / (D_mid2 ** 0.5)
    w_proj2 = jax.random.uniform(kk[3], (D_in2, D_mid2), minval=-b2, maxval=b2).astype(dtype)
    b_proj2 = jax.random.uniform(kk[4], (D_in2,), minval=-b2, maxval=b2).astype(dtype)

    z2 = jax.block_until_ready(mlp_forward(x2, w_fc2, b_fc2, w_proj2, b_proj2))
    z2_ref = _ref_bf16(x2, w_fc2, b_fc2, w_proj2, b_proj2)
    assert z2.shape == (T2, D_in2) and z2.dtype == dtype
    assert jnp.allclose(z2.astype(jnp.float32), z2_ref, atol=2e-2, rtol=2e-2)

    print("KERNEL_OK")
</pallas_src>

<mosaic_0001>
module attributes {stable_mosaic.version = 11 : i64} {
  func.func @mlp_kernel(%arg0: i32, %arg1: memref<16x128xbf16, #tpu.memory_space<vmem>>, %arg2: memref<128x128xbf16, #tpu.memory_space<vmem>>, %arg3: memref<1x128xf32, #tpu.memory_space<vmem>>, %arg4: memref<128x128xbf16, #tpu.memory_space<vmem>>, %arg5: memref<1x128xf32, #tpu.memory_space<vmem>>, %arg6: memref<16x128xbf16, #tpu.memory_space<vmem>>) attributes {dimension_semantics = [#tpu.dimension_semantics<parallel>], iteration_bounds = array<i64: 1>, scalar_prefetch = 0 : i64, scratch_operands = 0 : i64, tpu.core_type = #tpu.core_type<tc>, window_params = [{transform_indices = @transform_0, window_bounds = array<i64: 16, 128>}, {pipeline_mode = #tpu.pipeline_mode<synchronous>, transform_indices = @transform_1, window_bounds = array<i64: 128, 128>}, {pipeline_mode = #tpu.pipeline_mode<synchronous>, transform_indices = @transform_2, window_bounds = array<i64: 1, 128>}, {pipeline_mode = #tpu.pipeline_mode<synchronous>, transform_indices = @transform_3, window_bounds = array<i64: 128, 128>}, {pipeline_mode = #tpu.pipeline_mode<synchronous>, transform_indices = @transform_4, window_bounds = array<i64: 1, 128>}, {transform_indices = @transform_5, window_bounds = array<i64: 16, 128>}]} {
    %c0 = arith.constant 0 : index
    %c0_0 = arith.constant 0 : index
    %0 = vector.load %arg1[%c0, %c0_0] : memref<16x128xbf16, #tpu.memory_space<vmem>>, vector<16x128xbf16>
    %c0_1 = arith.constant 0 : index
    %c0_2 = arith.constant 0 : index
    %1 = vector.load %arg2[%c0_1, %c0_2] : memref<128x128xbf16, #tpu.memory_space<vmem>>, vector<128x128xbf16>
    %cst = arith.constant dense<0.000000e+00> : vector<16x128xf32>
    %2 = tpu.matmul %0, %1, %cst {dimension_numbers = #tpu.dot_dimension_numbers<[1], [0], [0], [1], [0, 0, 1, 1], [], []>} : vector<16x128xbf16>, vector<128x128xbf16>, vector<16x128xf32> -> vector<16x128xf32>
    %c0_3 = arith.constant 0 : index
    %c0_4 = arith.constant 0 : index
    %3 = vector.load %arg3[%c0_3, %c0_4] : memref<1x128xf32, #tpu.memory_space<vmem>>, vector<1x128xf32>
    %4 = vector.broadcast %3 : vector<1x128xf32> to vector<16x128xf32>
    %5 = arith.addf %2, %4 : vector<16x128xf32>
    %6 = arith.truncf %5 : vector<16x128xf32> to vector<16x128xbf16>
    %c0_5 = arith.constant 0 : index
    %c0_6 = arith.constant 0 : index
    %7 = vector.load %arg4[%c0_5, %c0_6] : memref<128x128xbf16, #tpu.memory_space<vmem>>, vector<128x128xbf16>
    %cst_7 = arith.constant dense<0.000000e+00> : vector<16x128xf32>
    %8 = tpu.matmul %6, %7, %cst_7 {dimension_numbers = #tpu.dot_dimension_numbers<[1], [0], [0], [1], [0, 0, 1, 1], [], []>} : vector<16x128xbf16>, vector<128x128xbf16>, vector<16x128xf32> -> vector<16x128xf32>
    %c0_8 = arith.constant 0 : index
    %c0_9 = arith.constant 0 : index
    %9 = vector.load %arg5[%c0_8, %c0_9] : memref<1x128xf32, #tpu.memory_space<vmem>>, vector<1x128xf32>
    %10 = vector.broadcast %9 : vector<1x128xf32> to vector<16x128xf32>
    %11 = arith.addf %8, %10 : vector<16x128xf32>
    %12 = arith.truncf %11 : vector<16x128xf32> to vector<16x128xbf16>
    %c0_10 = arith.constant 0 : index
    %c0_11 = arith.constant 0 : index
    %13 = vector.load %arg6[%c0_10, %c0_11] : memref<16x128xbf16, #tpu.memory_space<vmem>>, vector<16x128xbf16>
    tpu.vector_store %arg6[%c0_10, %c0_11], %12 {strides = array<i32>} : memref<16x128xbf16, #tpu.memory_space<vmem>>, vector<16x128xbf16>,
    return
  }
  func.func @transform_0(%arg0: i32) -> (i32, i32) {
    %c0_i32 = arith.constant 0 : i32
    %c0_i32_0 = arith.constant 0 : i32
    return %arg0, %c0_i32 : i32, i32
  }
  func.func @transform_1(%arg0: i32) -> (i32, i32) {
    %c0_i32 = arith.constant 0 : i32
    %c0_i32_0 = arith.constant 0 : i32
    %c0_i32_1 = arith.constant 0 : i32
    return %c0_i32, %c0_i32_0 : i32, i32
  }
  func.func @transform_2(%arg0: i32) -> (i32, i32) {
    %c0_i32 = arith.constant 0 : i32
    %c0_i32_0 = arith.constant 0 : i32
    %c0_i32_1 = arith.constant 0 : i32
    return %c0_i32, %c0_i32_0 : i32, i32
  }
  func.func @transform_3(%arg0: i32) -> (i32, i32) {
    %c0_i32 = arith.constant 0 : i32
    %c0_i32_0 = arith.constant 0 : i32
    %c0_i32_1 = arith.constant 0 : i32
    return %c0_i32, %c0_i32_0 : i32, i32
  }
  func.func @transform_4(%arg0: i32) -> (i32, i32) {
    %c0_i32 = arith.constant 0 : i32
    %c0_i32_0 = arith.constant 0 : i32
    %c0_i32_1 = arith.constant 0 : i32
    return %c0_i32, %c0_i32_0 : i32, i32
  }
  func.func @transform_5(%arg0: i32) -> (i32, i32) {
    %c0_i32 = arith.constant 0 : i32
    %c0_i32_0 = arith.constant 0 : i32
    return %arg0, %c0_i32 : i32, i32
  }
}

</mosaic_0001>

<llo_original>
// kernel: tpu_custom_call.1
$region0: #{tpu_custom_call.1}
  #allocation0 [shape = 'u32[]', space=smem, size = 0x4, offset = 0x4, fixed_abs, tag = 'smem constant byte address 0x4 - core index']
  #allocation1 [shape = 'u32[144,128]{1,0:T(1,128)}', space=vmem, size = 0x12000, scoped, tag = 'internal scratch']
  %s0 = inlined_call_operand.hbm [shape: bf16[16,128], index: 0, kind: input, shape index: {}]
  %s1 = inlined_call_operand.hbm [shape: bf16[128,128], index: 1, kind: input, shape index: {}]
  %s2 = inlined_call_operand.vmem [shape: f32[1,128], index: 2, kind: input, shape index: {}]
  %s3 = inlined_call_operand.hbm [shape: bf16[128,128], index: 3, kind: input, shape index: {}]
  %s4 = inlined_call_operand.vmem [shape: f32[1,128], index: 4, kind: input, shape index: {}]
  %s5 = inlined_call_operand.hbm [shape: bf16[16,128], index: 5, kind: output, shape index: {}]
  %s6 = sld [smem:[#allocation0]]
  $region42: #{tpu_custom_call.1} parent=0
    _
  %s8 = ssub.s32 1, %s6
  %s9 = scalar_select 0, %s8, %s6
  $region1: #{tpu_custom_call.1} parent=0
    #allocation2 [shape = 'u8[4096]{0}', space=vmem, size = 0x1000, scoped, tag = 'input window, operand 0, single buffered']
    #allocation3 [shape = 's32[1]{0}', space=sflag, size = 0x4, scoped, tag = 'scoped memory for tpu_custom_call.1']
    #allocation4 [shape = 's32[1]{0}', space=sflag, size = 0x4, scoped, tag = 'scoped memory for tpu_custom_call.1']
    #allocation5 [shape = 'u8[32768]{0}', space=vmem, size = 0x8000, scoped, tag = 'input window, operand 1, single buffered']
    #allocation6 [shape = 's32[1]{0}', space=sflag, size = 0x4, scoped, tag = 'scoped memory for tpu_custom_call.1']
    #allocation7 [shape = 'u8[32768]{0}', space=vmem, size = 0x8000, scoped, tag = 'input window, operand 3, single buffered']
    #allocation8 [shape = 'u8[4096]{0}', space=vmem, size = 0x1000, scoped, tag = 'output window, operand 0, single buffered']
    %10 = vsyncpa [#allocation3], 0
    %11 = vsyncpa [#allocation6], 0
    %12 = vsyncpa [#allocation4], 0
    // Predicated region
    $region2: #{tpu_custom_call.1} parent=1 // pred_check
      _
    $region3: #{tpu_custom_call.1} parent=1 // pred_check_branch
      %14 = sbr.rel (0) target = $region5
    $region4: #{tpu_custom_call.1} parent=1 // pred_region
      %s16 = ssub.s32 128, 128
      %17 = vsyncadd [#allocation3], %s16
      %s18 = sshll.u32 [#allocation2], 4
      %s19 = int_to_ptr.vmem [resolvable:$true] %s18
      %24 = dma.hbm_to_vmem [thread:$0]  %s0, 128, %s19, [#allocation3], 64, 64, 4
    $region5: #{tpu_custom_call.1} parent=1 // pred_fallthru
      _
    // Predicated region
    $region6: #{tpu_custom_call.1} parent=1 // pred_check
      _
    $region7: #{tpu_custom_call.1} parent=1 // pred_check_branch
      %26 = sbr.rel (0) target = $region9
    $region8: #{tpu_custom_call.1} parent=1 // pred_region
      %s28 = ssub.s32 1024, 1024
      %29 = vsyncadd [#allocation6], %s28
      %s30 = sshll.u32 [#allocation5], 4
      %s31 = int_to_ptr.vmem [resolvable:$true] %s30
      %36 = dma.hbm_to_vmem [thread:$0]  %s1, 1024, %s31, [#allocation6], 64, 64, 4
    $region9: #{tpu_custom_call.1} parent=1 // pred_fallthru
      _
    // Predicated region
    $region10: #{tpu_custom_call.1} parent=1 // pred_check
      _
    $region11: #{tpu_custom_call.1} parent=1 // pred_check_branch
      %38 = sbr.rel (0) target = $region13
    $region12: #{tpu_custom_call.1} parent=1 // pred_region
      _
    $region13: #{tpu_custom_call.1} parent=1 // pred_fallthru
      _
    // Predicated region
    $region14: #{tpu_custom_call.1} parent=1 // pred_check
      _
    $region15: #{tpu_custom_call.1} parent=1 // pred_check_branch
      %40 = sbr.rel (0) target = $region17
    $region16: #{tpu_custom_call.1} parent=1 // pred_region
      %s42 = ssub.s32 1024, 1024
      %43 = vsyncadd [#allocation6], %s42
      %s44 = sshll.u32 [#allocation7], 4
      %s45 = int_to_ptr.vmem [resolvable:$true] %s44
      %50 = dma.hbm_to_vmem [thread:$0]  %s3, 1024, %s45, [#allocation6], 64, 64, 4
    $region17: #{tpu_custom_call.1} parent=1 // pred_fallthru
      _
    // Predicated region
    $region18: #{tpu_custom_call.1} parent=1 // pred_check
      _
    $region19: #{tpu_custom_call.1} parent=1 // pred_check_branch
      %52 = sbr.rel (0) target = $region21
    $region20: #{tpu_custom_call.1} parent=1 // pred_region
      _
    $region21: #{tpu_custom_call.1} parent=1 // pred_fallthru
      _
    // Predicated region
    $region22: #{tpu_custom_call.1} parent=1 // pred_check
      _
    $region23: #{tpu_custom_call.1} parent=1 // pred_check_branch
      %54 = sbr.rel (0) target = $region25
    $region24: #{tpu_custom_call.1} parent=1 // pred_region
      %55 = dma.done [#allocation3], 128
    $region25: #{tpu_custom_call.1} parent=1 // pred_fallthru
      _
    // Predicated region
    $region26: #{tpu_custom_call.1} parent=1 // pred_check
      _
    $region27: #{tpu_custom_call.1} parent=1 // pred_check_branch
      %57 = sbr.rel (0) target = $region29
    $region28: #{tpu_custom_call.1} parent=1 // pred_region
      %58 = dma.done [#allocation6], 1024
    $region29: #{tpu_custom_call.1} parent=1 // pred_fallthru
      _
    // Predicated region
    $region30: #{tpu_custom_call.1} parent=1 // pred_check
      _
    $region31: #{tpu_custom_call.1} parent=1 // pred_check_branch
      %60 = sbr.rel (0) target = $region33
    $region32: #{tpu_custom_call.1} parent=1 // pred_region
      %61 = dma.done [#allocation6], 1024
    $region33: #{tpu_custom_call.1} parent=1 // pred_fallthru
      _
    %v63 = vld [vmem:[#allocation2] sm:$0xf]
    %v64 = vld [vmem:[#allocation2 + $0x4] sm:$0xf]
    %v65 = vld [vmem:[#allocation5] sm:$0xf]
    %v66 = vld [vmem:[#allocation5 + $0x4] sm:$0xf]
    %v67 = vld [vmem:[#allocation5 + $0x8] sm:$0xf]
    %v68 = vld [vmem:[#allocation5 + $0xc] sm:$0xf]
    %v69 = vld [vmem:[#allocation5 + $0x10] sm:$0xf]
    %v70 = vld [vmem:[#allocation5 + $0x14] sm:$0xf]
    %v71 = vld [vmem:[#allocation5 + $0x18] sm:$0xf]
    %v72 = vld [vmem:[#allocation5 + $0x1c] sm:$0xf]
    %v73 = vld [vmem:[#allocation5 + $0x20] sm:$0xf]
    %v74 = vld [vmem:[#allocation5 + $0x24] sm:$0xf]
    %v75 = vld [vmem:[#allocation5 + $0x28] sm:$0xf]
    %v76 = vld [vmem:[#allocation5 + $0x2c] sm:$0xf]
    %v77 = vld [vmem:[#allocation5 + $0x30] sm:$0xf]
    %v78 = vld [vmem:[#allocation5 + $0x34] sm:$0xf]
    %v79 = vld [vmem:[#allocation5 + $0x38] sm:$0xf]
    %v80 = vld [vmem:[#allocation5 + $0x3c] sm:$0xf]
    %v81 = vld [vmem:[%s2] sm:$0x1]
    %v83 = vlaneseq
    %v84 = vshrl.u32 %v83, 7
    %v85 = vsub.s32 0, %v84
    %v86 = vrot.slane %v81, %v85
    %v90 = vunpack.c.l.b16 %v63
    %v91 = vunpack.c.l.b16 %v64
    %v92 = vpack.c.b16 %v91, %v90
    %v110 = vunpack.c.l.b16 %v65
    %v111 = vunpack.c.l.b16 %v66
    %v112 = vunpack.c.l.b16 %v67
    %v113 = vunpack.c.l.b16 %v68
    %v114 = vunpack.c.l.b16 %v69
    %v115 = vunpack.c.l.b16 %v70
    %v116 = vunpack.c.l.b16 %v71
    %v117 = vunpack.c.l.b16 %v72
    %v118 = vunpack.c.l.b16 %v73
    %v119 = vunpack.c.l.b16 %v74
    %v120 = vunpack.c.l.b16 %v75
    %v121 = vunpack.c.l.b16 %v76
    %v122 = vunpack.c.l.b16 %v77
    %v123 = vunpack.c.l.b16 %v78
    %v124 = vunpack.c.l.b16 %v79
    %v125 = vunpack.c.l.b16 %v80
    %v126 = vpack.c.b16 %v111, %v110
    %v127 = vpack.c.b16 %v113, %v112
    %v128 = vpack.c.b16 %v115, %v114
    %v129 = vpack.c.b16 %v117, %v116
    %v130 = vpack.c.b16 %v119, %v118
    %v131 = vpack.c.b16 %v121, %v120
    %v132 = vpack.c.b16 %v123, %v122
    %v133 = vpack.c.b16 %v125, %v124
    %142 = vmatprep.subr.bf16.mxu0 0
    %143 = vmatpush1.bf16.msra.mxu0 %v133
    %144 = vmatprep.subr.bf16.mxu0 0
    %145 = vmatpush1.bf16.msra.mxu0 %v132
    %146 = vmatprep.subr.bf16.mxu0 0
    %147 = vmatpush1.bf16.msra.mxu0 %v131
    %148 = vmatprep.subr.bf16.mxu0 0
    %149 = vmatpush1.bf16.msra.mxu0 %v130
    %150 = vmatprep.subr.bf16.mxu0 0
    %151 = vmatpush1.bf16.msra.mxu0 %v129
    %152 = vmatprep.subr.bf16.mxu0 0
    %153 = vmatpush1.bf16.msra.mxu0 %v128
    %154 = vmatprep.subr.bf16.mxu0 0
    %155 = vmatpush1.bf16.msra.mxu0 %v127
    %156 = vmatprep.subr.bf16.mxu0 0
    %157 = vmatpush1.bf16.msra.mxu0 %v126
    %158 = vmatprep.subr.bf16.mxu0 0
    %159 = vmatpush2.bf16.msra.mxu0 0
    %160 = vmatprep.subr.bf16.mxu0 0
    %161 = vmatpush2.bf16.msra.mxu0 0
    %162 = vmatprep.subr.bf16.mxu0 0
    %163 = vmatpush2.bf16.msra.mxu0 0
    %164 = vmatprep.subr.bf16.mxu0 0
    %165 = vmatpush2.bf16.msra.mxu0 0
    %166 = vmatprep.subr.bf16.mxu0 0
    %167 = vmatpush2.bf16.msra.mxu0 0
    %168 = vmatprep.subr.bf16.mxu0 0
    %169 = vmatpush2.bf16.msra.mxu0 0
    %170 = vmatprep.subr.bf16.mxu0 0
    %171 = vmatpush2.bf16.msra.mxu0 0
    %172 = vmatprep.subr.bf16.mxu0 0
    %173 = vmatpush2.bf16.msra.mxu0 0
    %174 = vmatprep.mubr.bf16.mxu0 0
    %175 = vmatmul.mubr.bf16.gmra.mxu0 %v92
    %v176 = vpop.f32.mrf.mxu0
    %v177 = vadd.f32 %v86, %v176
    %v178 = vpop.f32.mrf.mxu0
    %v179 = vpop.f32.mrf.mxu0
    %v180 = vadd.f32 %v86, %v179
    %v181 = vpop.f32.mrf.mxu0
    %182 = vdwg.mxu0
    %v183 = vpack.c.bf16 %v180, %v177
    %v184 = vld [vmem:[#allocation7] sm:$0xf]
    %v185 = vld [vmem:[#allocation7 + $0x4] sm:$0xf]
    %v186 = vld [vmem:[#allocation7 + $0x8] sm:$0xf]
    %v187 = vld [vmem:[#allocation7 + $0xc] sm:$0xf]
    %v188 = vld [vmem:[#allocation7 + $0x10] sm:$0xf]
    %v189 = vld [vmem:[#allocation7 + $0x14] sm:$0xf]
    %v190 = vld [vmem:[#allocation7 + $0x18] sm:$0xf]
    %v191 = vld [vmem:[#allocation7 + $0x1c] sm:$0xf]
    %v192 = vld [vmem:[#allocation7 + $0x20] sm:$0xf]
    %v193 = vld [vmem:[#allocation7 + $0x24] sm:$0xf]
    %v194 = vld [vmem:[#allocation7 + $0x28] sm:$0xf]
    %v195 = vld [vmem:[#allocation7 + $0x2c] sm:$0xf]
    %v196 = vld [vmem:[#allocation7 + $0x30] sm:$0xf]
    %v197 = vld [vmem:[#allocation7 + $0x34] sm:$0xf]
    %v198 = vld [vmem:[#allocation7 + $0x38] sm:$0xf]
    %v199 = vld [vmem:[#allocation7 + $0x3c] sm:$0xf]
    %v200 = vld [vmem:[%s4] sm:$0x1]
    %v202 = vlaneseq
    %v203 = vshrl.u32 %v202, 7
    %v204 = vsub.s32 0, %v203
    %v205 = vrot.slane %v200, %v204
    %v223 = vunpack.c.l.b16 %v184
    %v224 = vunpack.c.l.b16 %v185
    %v225 = vunpack.c.l.b16 %v186
    %v226 = vunpack.c.l.b16 %v187
    %v227 = vunpack.c.l.b16 %v188
    %v228 = vunpack.c.l.b16 %v189
    %v229 = vunpack.c.l.b16 %v190
    %v230 = vunpack.c.l.b16 %v191
    %v231 = vunpack.c.l.b16 %v192
    %v232 = vunpack.c.l.b16 %v193
    %v233 = vunpack.c.l.b16 %v194
    %v234 = vunpack.c.l.b16 %v195
    %v235 = vunpack.c.l.b16 %v196
    %v236 = vunpack.c.l.b16 %v197
    %v237 = vunpack.c.l.b16 %v198
    %v238 = vunpack.c.l.b16 %v199
    %v239 = vpack.c.b16 %v224, %v223
    %v240 = vpack.c.b16 %v226, %v225
    %v241 = vpack.c.b16 %v228, %v227
    %v242 = vpack.c.b16 %v230, %v229
    %v243 = vpack.c.b16 %v232, %v231
    %v244 = vpack.c.b16 %v234, %v233
    %v245 = vpack.c.b16 %v236, %v235
    %v246 = vpack.c.b16 %v238, %v237
    %255 = vmatprep.subr.bf16.mxu0 0
    %256 = vmatpush1.bf16.msra.mxu0 %v246
    %257 = vmatprep.subr.bf16.mxu0 0
    %258 = vmatpush1.bf16.msra.mxu0 %v245
    %259 = vmatprep.subr.bf16.mxu0 0
    %260 = vmatpush1.bf16.msra.mxu0 %v244
    %261 = vmatprep.subr.bf16.mxu0 0
    %262 = vmatpush1.bf16.msra.mxu0 %v243
    %263 = vmatprep.subr.bf16.mxu0 0
    %264 = vmatpush1.bf16.msra.mxu0 %v242
    %265 = vmatprep.subr.bf16.mxu0 0
    %266 = vmatpush1.bf16.msra.mxu0 %v241
    %267 = vmatprep.subr.bf16.mxu0 0
    %268 = vmatpush1.bf16.msra.mxu0 %v240
    %269 = vmatprep.subr.bf16.mxu0 0
    %270 = vmatpush1.bf16.msra.mxu0 %v239
    %271 = vmatprep.subr.bf16.mxu0 0
    %272 = vmatpush2.bf16.msra.mxu0 0
    %273 = vmatprep.subr.bf16.mxu0 0
    %274 = vmatpush2.bf16.msra.mxu0 0
    %275 = vmatprep.subr.bf16.mxu0 0
    %276 = vmatpush2.bf16.msra.mxu0 0
    %277 = vmatprep.subr.bf16.mxu0 0
    %278 = vmatpush2.bf16.msra.mxu0 0
    %279 = vmatprep.subr.bf16.mxu0 0
    %280 = vmatpush2.bf16.msra.mxu0 0
    %281 = vmatprep.subr.bf16.mxu0 0
    %282 = vmatpush2.bf16.msra.mxu0 0
    %283 = vmatprep.subr.bf16.mxu0 0
    %284 = vmatpush2.bf16.msra.mxu0 0
    %285 = vmatprep.subr.bf16.mxu0 0
    %286 = vmatpush2.bf16.msra.mxu0 0
    %287 = vmatprep.mubr.bf16.mxu0 0
    %288 = vmatmul.mubr.bf16.gmra.mxu0 %v183
    %v289 = vpop.f32.mrf.mxu0
    %v290 = vadd.f32 %v205, %v289
    %v291 = vpop.f32.mrf.mxu0
    %v292 = vpop.f32.mrf.mxu0
    %v293 = vadd.f32 %v205, %v292
    %v294 = vpop.f32.mrf.mxu0
    %295 = vdwg.mxu0
    %v296 = vpack.c.bf16 %v293, %v290
    %v298 = vunpack.c.l.b16 %v296
    %v299 = vunpack.c.h.b16 %v296
    %v300 = vpack.c.b16 %v298, %v298
    %v301 = vpack.c.b16 %v299, %v299
    %304 = vst [vmem:[#allocation8] sm:$0xf] %v300
    %305 = vst [vmem:[#allocation8 + $0x4] sm:$0xf] %v301
    // Predicated region
    $region34: #{tpu_custom_call.1} parent=1 // pred_check
      _
    $region35: #{tpu_custom_call.1} parent=1 // pred_check_branch
      %307 = sbr.rel (0) target = $region37
    $region36: #{tpu_custom_call.1} parent=1 // pred_region
      %s309 = ssub.s32 128, 128
      %310 = vsyncadd [#allocation4], %s309
      %s311 = sshll.u32 [#allocation8], 4
      %s312 = int_to_ptr.vmem [resolvable:$true] %s311
      %317 = dma.vmem_to_hbm [thread:$0]  %s312, 128, %s5, [#allocation4], 64, 64, 4
    $region37: #{tpu_custom_call.1} parent=1 // pred_fallthru
      _
    // Predicated region
    $region38: #{tpu_custom_call.1} parent=1 // pred_check
      _
    $region39: #{tpu_custom_call.1} parent=1 // pred_check_branch
      %319 = sbr.rel (0) target = $region41
    $region40: #{tpu_custom_call.1} parent=1 // pred_region
      %320 = dma.done [#allocation4], 128
    $region41: #{tpu_custom_call.1} parent=1 // pred_fallthru
      _
    %321 = vsyncpa [#allocation3], 1
    %322 = vsyncpa [#allocation6], 1
    %323 = vsyncpa [#allocation4], 1

</llo_original>
